<compile_context>
chip_gen: v6e
topology: v6e:2x2x1
jax: 0.10.0
libtpu: 0.0.40
codegen_flags: <defaults>
</compile_context>

<pallas_src>
import jax
import jax.numpy as jnp
from jax.experimental import pallas as pl
from jax.experimental.pallas import tpu as pltpu

_LANES = 128
_PAD_LOGIT = -100.0  # sigmoid(-100), bce(-100, 0) < 1e-43  ->  contributes ~0


def _tpu_config():
    """Returns (num_tensorcores, per-block f32 byte budget, scoped vmem limit)."""
    try:
        vmem = pltpu.get_tpu_info().vmem_capacity_bytes
    except Exception:  # no info available -> conservative, safe everywhere
        vmem = None
    if vmem is not None and vmem > (96 << 20):
        # v5e / v6e: 128 MiB VMEM, single TensorCore.
        return 1, (4 << 20), 64 * 1024 * 1024
    # v7x: 64 MiB per TC, 2 TCs per chip (or unknown -> conservative settings).
    num_tc = 2 if vmem is not None else 1
    return num_tc, (2 << 20), 32 * 1024 * 1024


def _make_kernel(needs_mask, k_seq, tm, valid_rows):
    def kernel(x_ref, t_ref, acc_ref):
        k = pl.program_id(2)

        @pl.when(k == 0)
        def _init():
            acc_ref[...] = jnp.zeros_like(acc_ref)

        x = x_ref[...].astype(jnp.float32)        # (bn, tm, 128)
        t = t_ref[...].astype(jnp.float32)

        if needs_mask:
            # Mask rows past the real row count (ragged / over-covered chunks).
            row0 = (pl.program_id(1) * k_seq + k) * tm
            rows = jax.lax.broadcasted_iota(jnp.int32, (tm, _LANES), 0) + row0
            ok = (rows < valid_rows)[None]         # (1, tm, 128)
            x = jnp.where(ok, x, _PAD_LOGIT)
            t = jnp.where(ok, t, 0.0)

        e = jnp.exp(-jnp.abs(x))                   # single exp per element
        # PyTorch-stable BCE with logits: max(x,0) - x*t + log1p(exp(-|x|))
        bce = jnp.maximum(x, 0.0) - x * t + jnp.log1p(e)
        # sigmoid(x) reusing e: approx reciprocal + one Newton refinement.
        d = 1.0 + e
        inv = pl.reciprocal(d, approx=True)
        inv = inv * (2.0 - d * inv)
        p = jnp.where(x >= 0.0, inv, e * inv)

        # Pack the four sublane-reduced partials into one lane-dense block.
        partial = jnp.concatenate(
            [jnp.sum(bce, axis=1),
             jnp.sum(p * t, axis=1),
             jnp.sum(p, axis=1),
             jnp.sum(t, axis=1)], axis=0)          # (4*bn, 128)
        acc_ref[...] += partial[None, None]

    return kernel


def bce_dice_loss(logits, target):
    """Pallas implementation of BCEDiceLoss.forward. Returns a scalar."""
    assert logits.shape == target.shape
    n = logits.shape[0]
    m = 1
    for s in logits.shape[1:]:
        m *= s
    smooth = 1e-5

    num_tc, blk_budget, vmem_limit = _tpu_config()

    # ---- layout: (N, ...) -> (N, M) -> (N, R, 128); no HBM pad in the common case
    r = pl.cdiv(m, _LANES)
    xf = logits.reshape(n, m)
    tf = target.reshape(n, m)
    if r * _LANES != m:
        # Rare ragged-lane case: smallest pad that allows the free 3-D reshape.
        pad = r * _LANES - m
        xf = jnp.pad(xf, ((0, 0), (0, pad)), constant_values=_PAD_LOGIT)
        tf = jnp.pad(tf, ((0, 0), (0, pad)), constant_values=0)
    x3 = xf.reshape(n, r, _LANES)
    t3 = tf.reshape(n, r, _LANES)

    # ---- tiling (budget in f32 bytes: Mosaic materializes f32 temporaries) ----
    f32_row = _LANES * 4
    max_bn = max(1, blk_budget // (8 * f32_row))      # batch rows assuming tm=8
    bn = n if n <= max_bn else max(8, (max_bn // 8) * 8)
    nb = pl.cdiv(n, bn)

    tm = max(8, (blk_budget // (bn * f32_row)) // 8 * 8)
    if tm >= r:
        tm = r                                         # single full row-chunk
    kt = pl.cdiv(r, tm)

    p_par = num_tc if kt >= num_tc else 1              # megacore split (v7x only)
    k_seq = pl.cdiv(kt, p_par)
    needs_mask = (p_par * k_seq * tm) != r

    in_spec = pl.BlockSpec(
        (bn, tm, _LANES),
        lambda b, p, k: (b, jnp.minimum(p * k_seq + k, kt - 1), 0))
    out_spec = pl.BlockSpec((1, 1, 4 * bn, _LANES), lambda b, p, k: (p, b, 0, 0))
    out_sds = jax.ShapeDtypeStruct((p_par, nb, 4 * bn, _LANES), jnp.float32)

    kernel = _make_kernel(needs_mask, k_seq, tm, r)

    sums = pl.pallas_call(
        kernel,
        out_shape=out_sds,
        grid_spec=pltpu.PrefetchScalarGridSpec(
            num_scalar_prefetch=0,
            grid=(nb, p_par, k_seq),
            in_specs=[in_spec, in_spec],
            out_specs=out_spec,
        ),
        compiler_params=pltpu.CompilerParams(
            dimension_semantics=("parallel", "parallel", "arbitrary"),
            vmem_limit_bytes=vmem_limit,
        ),
    )(x3, t3)

    # ---- tiny glue: lane reduction + dice/bce combination ---------------------
    s = sums.reshape(p_par, nb, 4, bn, _LANES)
    tot = jnp.sum(s, axis=(0, 4))                      # (nb, 4, bn)
    tot = jnp.transpose(tot, (1, 0, 2)).reshape(4, nb * bn)[:, :n]   # (4, n)

    bce = jnp.sum(tot[0]) / (n * m)                    # mean over true elements
    inter, psum, tsum = tot[1], tot[2], tot[3]
    dice = (2.0 * inter + smooth) / (psum + tsum + smooth)
    dice_loss = 1.0 - jnp.sum(dice) / n
    return 0.5 * bce + dice_loss


def _reference_loss(logits, target):
    """Pure-JAX re-statement of the PyTorch forward, for verification."""
    x = logits.astype(jnp.float32)
    t = target.astype(jnp.float32)
    bce = jnp.mean(jnp.maximum(x, 0.0) - x * t + jnp.log1p(jnp.exp(-jnp.abs(x))))
    p = jax.nn.sigmoid(x)
    num = x.shape[0]
    pf = p.reshape(num, -1)
    tf = t.reshape(num, -1)
    smooth = 1e-5
    inter = jnp.sum(pf * tf, axis=1)
    dice = (2.0 * inter + smooth) / (jnp.sum(pf, axis=1) + jnp.sum(tf, axis=1) + smooth)
    dice = 1.0 - jnp.sum(dice) / num
    return 0.5 * bce + dice


if __name__ == "__main__":
    key = jax.random.PRNGKey(0)
    k1, k2 = jax.random.split(key)

    bs, c, h, w = 2, 4, 16, 16
    # input: raw logits; target: binary mask (as float).
    logits = jax.random.normal(k1, (bs, c, h, w), jnp.float32)
    target = (jax.random.uniform(k2, (bs, c, h, w)) > 0.5).astype(jnp.float32)

    loss = bce_dice_loss(logits, target)
    loss = jax.block_until_ready(loss)

    ref = jax.block_until_ready(_reference_loss(logits, target))
    assert jnp.allclose(loss, ref, rtol=1e-5, atol=1e-5), (loss, ref)

    print("KERNEL_OK")
</pallas_src>

<mosaic_0001>
module attributes {stable_mosaic.version = 11 : i64} {
  func.func @kernel(%arg0: i32, %arg1: i32, %arg2: i32, %arg3: memref<2x8x128xf32, #tpu.memory_space<vmem>>, %arg4: memref<2x8x128xf32, #tpu.memory_space<vmem>>, %arg5: memref<1x1x8x128xf32, #tpu.memory_space<vmem>>) attributes {dimension_semantics = [#tpu.dimension_semantics<parallel>, #tpu.dimension_semantics<parallel>, #tpu.dimension_semantics<arbitrary>], iteration_bounds = array<i64: 1, 1, 1>, scalar_prefetch = 0 : i64, scratch_operands = 0 : i64, tpu.core_type = #tpu.core_type<tc>, window_params = [{transform_indices = @transform_0, window_bounds = array<i64: 2, 8, 128>}, {transform_indices = @transform_1, window_bounds = array<i64: 2, 8, 128>}, {transform_indices = @transform_2, window_bounds = array<i64: 1, 1, 8, 128>}]} {
    %c0_i32 = arith.constant 0 : i32
    %0 = arith.cmpi eq, %arg2, %c0_i32 : i32
    %1 = arith.extui %0 : i1 to i32
    %c0_i32_0 = arith.constant 0 : i32
    %2 = arith.cmpi ne, %1, %c0_i32_0 : i32
    scf.if %2 {
      %cst_22 = arith.constant 0.000000e+00 : f32
      %36 = vector.broadcast %cst_22 : f32 to vector<1x1x8x128xf32>
      %c0_23 = arith.constant 0 : index
      %c0_24 = arith.constant 0 : index
      %c0_25 = arith.constant 0 : index
      %c0_26 = arith.constant 0 : index
      %37 = vector.load %arg5[%c0_23, %c0_24, %c0_25, %c0_26] : memref<1x1x8x128xf32, #tpu.memory_space<vmem>>, vector<1x1x8x128xf32>
      tpu.vector_store %arg5[%c0_23, %c0_24, %c0_25, %c0_26], %36 {strides = array<i32>} : memref<1x1x8x128xf32, #tpu.memory_space<vmem>>, vector<1x1x8x128xf32>,
    } else {
    }
    %c0 = arith.constant 0 : index
    %c0_1 = arith.constant 0 : index
    %c0_2 = arith.constant 0 : index
    %3 = vector.load %arg3[%c0, %c0_1, %c0_2] : memref<2x8x128xf32, #tpu.memory_space<vmem>>, vector<2x8x128xf32>
    %c0_3 = arith.constant 0 : index
    %c0_4 = arith.constant 0 : index
    %c0_5 = arith.constant 0 : index
    %4 = vector.load %arg4[%c0_3, %c0_4, %c0_5] : memref<2x8x128xf32, #tpu.memory_space<vmem>>, vector<2x8x128xf32>
    %5 = math.absf %3 : vector<2x8x128xf32>
    %cst = arith.constant 0.000000e+00 : f32
    %6 = vector.broadcast %cst : f32 to vector<2x8x128xf32>
    %7 = arith.subf %6, %5 : vector<2x8x128xf32>
    %8 = math.exp %7 : vector<2x8x128xf32>
    %cst_6 = arith.constant 0.000000e+00 : f32
    %9 = vector.broadcast %cst_6 : f32 to vector<2x8x128xf32>
    %10 = arith.maximumf %3, %9 : vector<2x8x128xf32>
    %11 = arith.mulf %3, %4 : vector<2x8x128xf32>
    %12 = arith.subf %10, %11 : vector<2x8x128xf32>
    %13 = math.log1p %8 : vector<2x8x128xf32>
    %14 = arith.addf %12, %13 : vector<2x8x128xf32>
    %cst_7 = arith.constant 1.000000e+00 : f32
    %15 = vector.broadcast %cst_7 : f32 to vector<2x8x128xf32>
    %16 = arith.addf %15, %8 : vector<2x8x128xf32>
    %17 = tpu.reciprocal %16 {approx = true} : vector<2x8x128xf32> -> vector<2x8x128xf32>
    %18 = arith.mulf %16, %17 : vector<2x8x128xf32>
    %cst_8 = arith.constant 2.000000e+00 : f32
    %19 = vector.broadcast %cst_8 : f32 to vector<2x8x128xf32>
    %20 = arith.subf %19, %18 : vector<2x8x128xf32>
    %21 = arith.mulf %17, %20 : vector<2x8x128xf32>
    %cst_9 = arith.constant 0.000000e+00 : f32
    %22 = vector.broadcast %cst_9 : f32 to vector<2x8x128xf32>
    %23 = arith.cmpf oge, %3, %22 : vector<2x8x128xf32>
    %24 = arith.mulf %8, %21 : vector<2x8x128xf32>
    %25 = arith.select %23, %21, %24 : vector<2x8x128xi1>, vector<2x8x128xf32>
    %cst_10 = arith.constant dense<0.000000e+00> : vector<2x128xf32>
    %26 = vector.multi_reduction <add>, %14, %cst_10 [1] : vector<2x8x128xf32> to vector<2x128xf32>
    %27 = arith.mulf %25, %4 : vector<2x8x128xf32>
    %cst_11 = arith.constant dense<0.000000e+00> : vector<2x128xf32>
    %28 = vector.multi_reduction <add>, %27, %cst_11 [1] : vector<2x8x128xf32> to vector<2x128xf32>
    %cst_12 = arith.constant dense<0.000000e+00> : vector<2x128xf32>
    %29 = vector.multi_reduction <add>, %25, %cst_12 [1] : vector<2x8x128xf32> to vector<2x128xf32>
    %cst_13 = arith.constant dense<0.000000e+00> : vector<2x128xf32>
    %30 = vector.multi_reduction <add>, %4, %cst_13 [1] : vector<2x8x128xf32> to vector<2x128xf32>
    %31 = tpu.concatenate %26, %28, %29, %30 in 0 : vector<2x128xf32>, vector<2x128xf32>, vector<2x128xf32>, vector<2x128xf32> -> vector<8x128xf32>
    %c0_14 = arith.constant 0 : index
    %c0_15 = arith.constant 0 : index
    %c0_16 = arith.constant 0 : index
    %c0_17 = arith.constant 0 : index
    %32 = vector.load %arg5[%c0_14, %c0_15, %c0_16, %c0_17] : memref<1x1x8x128xf32, #tpu.memory_space<vmem>>, vector<1x1x8x128xf32>
    %33 = vector.shape_cast %31 : vector<8x128xf32> to vector<1x1x8x128xf32>
    %34 = arith.addf %32, %33 : vector<1x1x8x128xf32>
    %c0_18 = arith.constant 0 : index
    %c0_19 = arith.constant 0 : index
    %c0_20 = arith.constant 0 : index
    %c0_21 = arith.constant 0 : index
    %35 = vector.load %arg5[%c0_18, %c0_19, %c0_20, %c0_21] : memref<1x1x8x128xf32, #tpu.memory_space<vmem>>, vector<1x1x8x128xf32>
    tpu.vector_store %arg5[%c0_18, %c0_19, %c0_20, %c0_21], %34 {strides = array<i32>} : memref<1x1x8x128xf32, #tpu.memory_space<vmem>>, vector<1x1x8x128xf32>,
    return
  }
  func.func @transform_0(%arg0: i32, %arg1: i32, %arg2: i32) -> (i32, i32, i32) {
    %c1_i32 = arith.constant 1 : i32
    %0 = arith.muli %arg1, %c1_i32 : i32
    %1 = arith.addi %0, %arg2 : i32
    %c0_i32 = arith.constant 0 : i32
    %2 = arith.minsi %1, %c0_i32 : i32
    %c0_i32_0 = arith.constant 0 : i32
    %c0_i32_1 = arith.constant 0 : i32
    return %arg0, %2, %c0_i32_0 : i32, i32, i32
  }
  func.func @transform_1(%arg0: i32, %arg1: i32, %arg2: i32) -> (i32, i32, i32) {
    %c1_i32 = arith.constant 1 : i32
    %0 = arith.muli %arg1, %c1_i32 : i32
    %1 = arith.addi %0, %arg2 : i32
    %c0_i32 = arith.constant 0 : i32
    %2 = arith.minsi %1, %c0_i32 : i32
    %c0_i32_0 = arith.constant 0 : i32
    %c0_i32_1 = arith.constant 0 : i32
    return %arg0, %2, %c0_i32_0 : i32, i32, i32
  }
  func.func @transform_2(%arg0: i32, %arg1: i32, %arg2: i32) -> (i32, i32, i32, i32) {
    %c0_i32 = arith.constant 0 : i32
    %c0_i32_0 = arith.constant 0 : i32
    %c0_i32_1 = arith.constant 0 : i32
    return %arg1, %arg0, %c0_i32, %c0_i32_0 : i32, i32, i32, i32
  }
}

</mosaic_0001>

<llo_original>
// kernel: tpu_custom_call.1
$region0: #{tpu_custom_call.1}
  #allocation0 [shape = 'u32[]', space=smem, size = 0x4, offset = 0x4, fixed_abs, tag = 'smem constant byte address 0x4 - core index']
  #allocation1 [shape = 'u32[144,128]{1,0:T(1,128)}', space=vmem, size = 0x12000, scoped, tag = 'internal scratch']
  %s0 = inlined_call_operand.hbm [shape: f32[2,8,128], index: 0, kind: input, shape index: {}]
  %s1 = inlined_call_operand.hbm [shape: f32[2,8,128], index: 1, kind: input, shape index: {}]
  %s2 = inlined_call_operand.hbm [shape: f32[1,1,8,128], index: 2, kind: output, shape index: {}]
  %s3 = sld [smem:[#allocation0]]
  $region30: #{tpu_custom_call.1} parent=0
    _
  %s5 = ssub.s32 1, %s3
  %s6 = scalar_select 0, %s5, %s3
  $region1: #{tpu_custom_call.1} parent=0
    #allocation2 [shape = 'u8[8192]{0}', space=vmem, size = 0x2000, scoped, tag = 'input window, operand 0, single buffered']
    #allocation3 [shape = 's32[1]{0}', space=sflag, size = 0x4, scoped, tag = 'scoped memory for tpu_custom_call.1']
    #allocation4 [shape = 's32[1]{0}', space=sflag, size = 0x4, scoped, tag = 'scoped memory for tpu_custom_call.1']
    #allocation5 [shape = 'u8[8192]{0}', space=vmem, size = 0x2000, scoped, tag = 'input window, operand 1, single buffered']
    #allocation6 [shape = 's32[1]{0}', space=sflag, size = 0x4, scoped, tag = 'scoped memory for tpu_custom_call.1']
    #allocation7 [shape = 'u8[4096]{0}', space=vmem, size = 0x1000, scoped, tag = 'output window, operand 0, single buffered']
    %7 = vsyncpa [#allocation3], 0
    %8 = vsyncpa [#allocation6], 0
    %9 = vsyncpa [#allocation4], 0
    // Predicated region
    $region2: #{tpu_custom_call.1} parent=1 // pred_check
      _
    $region3: #{tpu_custom_call.1} parent=1 // pred_check_branch
      %11 = sbr.rel (0) target = $region5
    $region4: #{tpu_custom_call.1} parent=1 // pred_region
      %s12 = sadd.s32 0, 0
      %p13 = scmp.lt.s32.totalorder %s12, 0
      %s14 = scalar_select %p13, %s12, 0
      %s16 = ssub.s32 256, 256
      %17 = vsyncadd [#allocation3], %s16
      %s18 = smul.addr %s14, 128
      %s19 = scalar_lea.hbm %s0, %s18
      %s20 = sshll.u32 [#allocation2], 4
      %s21 = int_to_ptr.vmem [resolvable:$true] %s20
      %26 = dma.hbm_to_vmem [thread:$0]  %s19, 256, %s21, [#allocation3], 128, 128, 8
    $region5: #{tpu_custom_call.1} parent=1 // pred_fallthru
      _
    // Predicated region
    $region6: #{tpu_custom_call.1} parent=1 // pred_check
      _
    $region7: #{tpu_custom_call.1} parent=1 // pred_check_branch
      %28 = sbr.rel (0) target = $region9
    $region8: #{tpu_custom_call.1} parent=1 // pred_region
      %s29 = sadd.s32 0, 0
      %p30 = scmp.lt.s32.totalorder %s29, 0
      %s31 = scalar_select %p30, %s29, 0
      %s33 = ssub.s32 256, 256
      %34 = vsyncadd [#allocation6], %s33
      %s35 = smul.addr %s31, 128
      %s36 = scalar_lea.hbm %s1, %s35
      %s37 = sshll.u32 [#allocation5], 4
      %s38 = int_to_ptr.vmem [resolvable:$true] %s37
      %43 = dma.hbm_to_vmem [thread:$0]  %s36, 256, %s38, [#allocation6], 128, 128, 8
    $region9: #{tpu_custom_call.1} parent=1 // pred_fallthru
      _
    // Predicated region
    $region10: #{tpu_custom_call.1} parent=1 // pred_check
      _
    $region11: #{tpu_custom_call.1} parent=1 // pred_check_branch
      %45 = sbr.rel (0) target = $region13
    $region12: #{tpu_custom_call.1} parent=1 // pred_region
      %46 = dma.done [#allocation3], 256
    $region13: #{tpu_custom_call.1} parent=1 // pred_fallthru
      _
    // Predicated region
    $region14: #{tpu_custom_call.1} parent=1 // pred_check
      _
    $region15: #{tpu_custom_call.1} parent=1 // pred_check_branch
      %48 = sbr.rel (0) target = $region17
    $region16: #{tpu_custom_call.1} parent=1 // pred_region
      %49 = dma.done [#allocation6], 256
    $region17: #{tpu_custom_call.1} parent=1 // pred_fallthru
      _
    %s50 = sadd.s32 0, 0
    %p51 = scmp.lt.s32.totalorder %s50, 0
    %s52 = scalar_select %p51, %s50, 0
    %s53 = sadd.s32 0, 0
    %p54 = scmp.lt.s32.totalorder %s53, 0
    %s55 = scalar_select %p54, %s53, 0
    %p56 = scmp.eq.s32.totalorder 0, 0
    // Predicated region
    $region18: #{tpu_custom_call.1} parent=1 // pred_check
      %p57 = pneg %p56
    $region19: #{tpu_custom_call.1} parent=1 // pred_check_branch
      %59 = sbr.rel (%p57) target = $region21
    $region20: #{tpu_custom_call.1} parent=1 // pred_region
      %60 = vst [vmem:[#allocation7] sm:$0xff] 0.0
    $region21: #{tpu_custom_call.1} parent=1 // pred_fallthru
      _
    %v61 = vld [vmem:[#allocation2] sm:$0xff]
    %v62 = vld [vmem:[#allocation2 + $0x8] sm:$0xff]
    %v63 = vld [vmem:[#allocation5] sm:$0xff]
    %v64 = vld [vmem:[#allocation5 + $0x8] sm:$0xff]
    %v65 = vand.u32 2147483647, %v61
    %v66 = vand.u32 2147483647, %v62
    %v67 = vsub.f32 0.0, %v65
    %v68 = vsub.f32 0.0, %v66
    %v69 = vmul.f32 %v67, 1.442695
    %v70 = vpow.pop %v69
    %v71 = vmul.f32 %v68, 1.442695
    %v72 = vpow.pop %v71
    %v73 = vmax.f32 %v61, 0.0
    %v74 = vmax.f32 %v62, 0.0
    %v75 = vmul.f32 %v61, %v63
    %v76 = vmul.f32 %v62, %v64
    %v77 = vsub.f32 %v73, %v75
    %v78 = vsub.f32 %v74, %v76
    %v79 = vadd.f32 %v70, 1.0
    %v80 = vlog2.pop %v79
    %v81 = vmul.f32 %v80, 0.6931472
    %v82 = vmul.f32 -0.5, %v70
    %v83 = vadd.f32 %v82, 1.0
    %v84 = vmul.f32 %v83, %v70
    %v85 = vand.u32 2147483647, %v70
    %vm86 = vcmp.lt.f32.partialorder %v85, 0.0004427343
    %v87 = vsel %vm86, %v84, %v81
    %v88 = vadd.f32 %v72, 1.0
    %v89 = vlog2.pop %v88
    %v90 = vmul.f32 %v89, 0.6931472
    %v91 = vmul.f32 -0.5, %v72
    %v92 = vadd.f32 %v91, 1.0
    %v93 = vmul.f32 %v92, %v72
    %v94 = vand.u32 2147483647, %v72
    %vm95 = vcmp.lt.f32.partialorder %v94, 0.0004427343
    %v96 = vsel %vm95, %v93, %v90
    %v97 = vadd.f32 %v77, %v87
    %v98 = vadd.f32 %v78, %v96
    %v99 = vadd.f32 %v70, 1.0
    %v100 = vadd.f32 %v72, 1.0
    %v101 = vrcp.pop %v99
    %v102 = vrcp.pop %v100
    %v103 = vmul.f32 %v99, %v101
    %v104 = vmul.f32 %v100, %v102
    %v105 = vsub.f32 2.0, %v103
    %v106 = vsub.f32 2.0, %v104
    %v107 = vmul.f32 %v101, %v105
    %v108 = vmul.f32 %v102, %v106
    %vm109 = vcmp.ge.f32.partialorder %v61, 0.0
    %vm110 = vcmp.ge.f32.partialorder %v62, 0.0
    %v111 = vmul.f32 %v70, %v107
    %v112 = vmul.f32 %v72, %v108
    %v113 = vsel %vm109, %v107, %v111
    %v114 = vsel %vm110, %v108, %v112
    %v115 = vrot.slane %v97, 4
    %v116 = vadd.f32 %v97, %v115
    %v117 = vrot.slane %v116, 2
    %v118 = vadd.f32 %v116, %v117
    %v119 = vrot.slane %v118, 1
    %v120 = vadd.f32 %v118, %v119
    %v121 = vrot.slane %v98, 4
    %v122 = vadd.f32 %v98, %v121
    %v123 = vrot.slane %v122, 2
    %v124 = vadd.f32 %v122, %v123
    %v125 = vrot.slane %v124, 1
    %v126 = vadd.f32 %v124, %v125
    %v127 = vmul.f32 %v113, %v63
    %v128 = vmul.f32 %v114, %v64
    %v129 = vrot.slane %v127, 4
    %v130 = vadd.f32 %v127, %v129
    %v131 = vrot.slane %v130, 2
    %v132 = vadd.f32 %v130, %v131
    %v133 = vrot.slane %v132, 1
    %v134 = vadd.f32 %v132, %v133
    %v135 = vrot.slane %v128, 4
    %v136 = vadd.f32 %v128, %v135
    %v137 = vrot.slane %v136, 2
    %v138 = vadd.f32 %v136, %v137
    %v139 = vrot.slane %v138, 1
    %v140 = vadd.f32 %v138, %v139
    %v141 = vrot.slane %v113, 4
    %v142 = vadd.f32 %v113, %v141
    %v143 = vrot.slane %v142, 2
    %v144 = vadd.f32 %v142, %v143
    %v145 = vrot.slane %v144, 1
    %v146 = vadd.f32 %v144, %v145
    %v147 = vrot.slane %v114, 4
    %v148 = vadd.f32 %v114, %v147
    %v149 = vrot.slane %v148, 2
    %v150 = vadd.f32 %v148, %v149
    %v151 = vrot.slane %v150, 1
    %v152 = vadd.f32 %v150, %v151
    %v153 = vrot.slane %v63, 4
    %v154 = vadd.f32 %v63, %v153
    %v155 = vrot.slane %v154, 2
    %v156 = vadd.f32 %v154, %v155
    %v157 = vrot.slane %v156, 1
    %v158 = vadd.f32 %v156, %v157
    %v159 = vrot.slane %v64, 4
    %v160 = vadd.f32 %v64, %v159
    %v161 = vrot.slane %v160, 2
    %v162 = vadd.f32 %v160, %v161
    %v163 = vrot.slane %v162, 1
    %v164 = vadd.f32 %v162, %v163
    %vm167 = vcmask 1041409
    %v168 = vsel %vm167, %v126, %v120
    %vm172 = vcmask 1043459
    %v173 = vsel %vm172, %v140, %v134
    %vm177 = vcmask 1045509
    %v178 = vsel %vm177, %v152, %v146
    %vm182 = vcmask 1047559
    %v183 = vsel %vm182, %v164, %v158
    %vm185 = vcmask 1041408
    %v186 = vsel %vm185, %v168, %v173
    %vm187 = vcmask 1043456
    %v188 = vsel %vm187, %v186, %v178
    %vm189 = vcmask 1045504
    %v190 = vsel %vm189, %v188, %v183
    %v191 = vld [vmem:[#allocation7] sm:$0xff]
    %v192 = vadd.f32 %v191, %v190
    %193 = vst [vmem:[#allocation7] sm:$0xff] %v192
    // Predicated region
    $region22: #{tpu_custom_call.1} parent=1 // pred_check
      _
    $region23: #{tpu_custom_call.1} parent=1 // pred_check_branch
      %195 = sbr.rel (0) target = $region25
    $region24: #{tpu_custom_call.1} parent=1 // pred_region
      %s197 = ssub.s32 128, 128
      %198 = vsyncadd [#allocation4], %s197
      %s200 = sshll.u32 [#allocation7], 4
      %s201 = int_to_ptr.vmem [resolvable:$true] %s200
      %203 = dma.vmem_to_hbm [thread:$0]  %s201, 128, %s2, [#allocation4]
    $region25: #{tpu_custom_call.1} parent=1 // pred_fallthru
      _
    // Predicated region
    $region26: #{tpu_custom_call.1} parent=1 // pred_check
      _
    $region27: #{tpu_custom_call.1} parent=1 // pred_check_branch
      %205 = sbr.rel (0) target = $region29
    $region28: #{tpu_custom_call.1} parent=1 // pred_region
      %206 = dma.done [#allocation4], 128
    $region29: #{tpu_custom_call.1} parent=1 // pred_fallthru
      _
    %207 = vsyncpa [#allocation3], 1
    %208 = vsyncpa [#allocation6], 1
    %209 = vsyncpa [#allocation4], 1

</llo_original>
